<compile_context>
chip_gen: v5e
topology: v5e:2x2
jax: 0.10.0
libtpu: 0.0.40
codegen_flags: <defaults>
</compile_context>

<pallas_src>
import jax
import jax.numpy as jnp
from jax.experimental import pallas as pl
from jax.experimental.pallas import tpu as pltpu

_LANE = 128
_TARGET_BLOCK_BYTES = 2 * 1024 * 1024   # ~2 MiB per block buffer


def _hsigmoid_kernel(x_ref, o_ref):
    x = x_ref[...].astype(jnp.float32)
    # relu6(3x + 3) / 6  ==  clip(0.5*x + 0.5, 0, 1): one FMA + clamp, no divide.
    y = jnp.minimum(jnp.maximum(x * 0.5 + 0.5, 0.0), 1.0)
    o_ref[...] = y.astype(o_ref.dtype)


def _sublane_multiple(dtype) -> int:
    itemsize = jnp.dtype(dtype).itemsize
    return max(8, 32 // itemsize)       # 8 for f32, 16 for bf16, 32 for int8/fp8


def _pick_cols(n: int) -> int:
    # Widest lane-dense column count that divides n exactly (no pad needed).
    for c in (8192, 4096, 2048, 1024, 512, 256, 128):
        if n % c == 0:
            return c
    return _LANE


def hsigmoid(x: jnp.ndarray) -> jnp.ndarray:
    """Applies relu6(3*x + 3)/6 elementwise. Works for any shape / float dtype."""
    orig_shape = x.shape
    orig_dtype = x.dtype
    n = x.size
    if n == 0:
        return x

    itemsize = jnp.dtype(orig_dtype).itemsize

    if n % _LANE == 0:
        # Fast path: pure reshape — no pad, no slice, no extra HBM passes.
        cols = _pick_cols(n)
        rows = n // cols
        x2d = x.reshape(rows, cols)
        pad = 0
    else:
        # Slow path: tail pad of < 128 elements only.
        cols = _LANE
        rows = pl.cdiv(n, cols)
        pad = rows * cols - n
        x2d = jnp.pad(x.reshape(-1), (0, pad)).reshape(rows, cols)

    sub = _sublane_multiple(orig_dtype)
    tile_rows = (_TARGET_BLOCK_BYTES // (cols * itemsize)) // sub * sub
    tile_rows = max(sub, tile_rows)
    if tile_rows >= rows:
        tile_rows = rows            # full-extent block is always legal

    grid = (pl.cdiv(rows, tile_rows),)

    out = pl.pallas_call(
        _hsigmoid_kernel,
        out_shape=jax.ShapeDtypeStruct((rows, cols), orig_dtype),
        grid_spec=pltpu.PrefetchScalarGridSpec(
            num_scalar_prefetch=0,
            grid=grid,
            in_specs=[pl.BlockSpec((tile_rows, cols), lambda i: (i, 0))],
            out_specs=pl.BlockSpec((tile_rows, cols), lambda i: (i, 0)),
        ),
        compiler_params=pltpu.CompilerParams(
            dimension_semantics=("parallel",)),   # megacore sharding on v7x
    )(x2d)

    if pad:
        return out.reshape(-1)[:n].reshape(orig_shape)
    return out.reshape(orig_shape)


def hsigmoid_ref(x: jnp.ndarray) -> jnp.ndarray:
    return jnp.clip(3.0 * x + 3.0, 0.0, 6.0) / 6.0


if __name__ == "__main__":
    key = jax.random.PRNGKey(0)
    # NCHW, matching the PyTorch module's typical usage.
    x = jax.random.normal(key, (2, 4, 16, 16), dtype=jnp.float32) * 2.0

    y = hsigmoid(x)
    jax.block_until_ready(y)

    y_ref = hsigmoid_ref(x)
    assert y.shape == x.shape and y.dtype == x.dtype
    assert jnp.allclose(y, y_ref, atol=1e-6, rtol=1e-6), "mismatch vs reference"

    # Also exercise the non-128-aligned (padded) path once.
    x_odd = jax.random.normal(jax.random.PRNGKey(1), (3, 5, 7), dtype=jnp.float32)
    y_odd = hsigmoid(x_odd)
    jax.block_until_ready(y_odd)
    assert y_odd.shape == x_odd.shape
    assert jnp.allclose(y_odd, hsigmoid_ref(x_odd), atol=1e-6, rtol=1e-6)

    print("KERNEL_OK")
</pallas_src>

<mosaic_0001>
module attributes {stable_mosaic.version = 11 : i64} {
  func.func @_hsigmoid_kernel(%arg0: i32, %arg1: memref<1x2048xf32, #tpu.memory_space<vmem>>, %arg2: memref<1x2048xf32, #tpu.memory_space<vmem>>) attributes {dimension_semantics = [#tpu.dimension_semantics<parallel>], iteration_bounds = array<i64: 1>, scalar_prefetch = 0 : i64, scratch_operands = 0 : i64, tpu.core_type = #tpu.core_type<tc>, window_params = [{transform_indices = @transform_0, window_bounds = array<i64: 1, 2048>}, {transform_indices = @transform_1, window_bounds = array<i64: 1, 2048>}]} {
    %c0 = arith.constant 0 : index
    %c0_0 = arith.constant 0 : index
    %0 = vector.load %arg1[%c0, %c0_0] : memref<1x2048xf32, #tpu.memory_space<vmem>>, vector<1x2048xf32>
    %cst = arith.constant 5.000000e-01 : f32
    %1 = vector.broadcast %cst : f32 to vector<1x2048xf32>
    %2 = arith.mulf %0, %1 : vector<1x2048xf32>
    %cst_1 = arith.constant 5.000000e-01 : f32
    %3 = vector.broadcast %cst_1 : f32 to vector<1x2048xf32>
    %4 = arith.addf %2, %3 : vector<1x2048xf32>
    %cst_2 = arith.constant 0.000000e+00 : f32
    %5 = vector.broadcast %cst_2 : f32 to vector<1x2048xf32>
    %6 = arith.maximumf %4, %5 : vector<1x2048xf32>
    %cst_3 = arith.constant 1.000000e+00 : f32
    %7 = vector.broadcast %cst_3 : f32 to vector<1x2048xf32>
    %8 = arith.minimumf %6, %7 : vector<1x2048xf32>
    %c0_4 = arith.constant 0 : index
    %c0_5 = arith.constant 0 : index
    %9 = vector.load %arg2[%c0_4, %c0_5] : memref<1x2048xf32, #tpu.memory_space<vmem>>, vector<1x2048xf32>
    tpu.vector_store %arg2[%c0_4, %c0_5], %8 {strides = array<i32>} : memref<1x2048xf32, #tpu.memory_space<vmem>>, vector<1x2048xf32>,
    return
  }
  func.func @transform_0(%arg0: i32) -> (i32, i32) {
    %c0_i32 = arith.constant 0 : i32
    %c0_i32_0 = arith.constant 0 : i32
    return %arg0, %c0_i32 : i32, i32
  }
  func.func @transform_1(%arg0: i32) -> (i32, i32) {
    %c0_i32 = arith.constant 0 : i32
    %c0_i32_0 = arith.constant 0 : i32
    return %arg0, %c0_i32 : i32, i32
  }
}

</mosaic_0001>

<llo_original>
// kernel: tpu_custom_call.1
$region0: #{tpu_custom_call.1}
  #allocation0 [shape = 'u32[]', space=smem, size = 0x4, offset = 0x4, fixed_abs, tag = 'smem constant byte address 0x4 - core index']
  #allocation1 [shape = 'u32[72,128]{1,0:T(1,128)}', space=vmem, size = 0x9000, scoped, tag = 'internal scratch']
  %s0 = inlined_call_operand.hbm [shape: f32[1,2048], index: 0, kind: input, shape index: {}]
  %s1 = inlined_call_operand.hbm [shape: f32[1,2048], index: 1, kind: output, shape index: {}]
  %s2 = sld [smem:[#allocation0]]
  $region18: #{tpu_custom_call.1} parent=0
    _
  %s4 = ssub.s32 1, %s2
  %s5 = scalar_select 0, %s4, %s2
  $region1: #{tpu_custom_call.1} parent=0
    #allocation2 [shape = 'u8[8192]{0}', space=vmem, size = 0x2000, scoped, tag = 'input window, operand 0, single buffered']
    #allocation3 [shape = 's32[1]{0}', space=sflag, size = 0x4, scoped, tag = 'scoped memory for tpu_custom_call.1']
    #allocation4 [shape = 's32[1]{0}', space=sflag, size = 0x4, scoped, tag = 'scoped memory for tpu_custom_call.1']
    #allocation5 [shape = 'u8[8192]{0}', space=vmem, size = 0x2000, scoped, tag = 'output window, operand 0, single buffered']
    %6 = vsyncpa [#allocation3], 0
    %7 = vsyncpa [#allocation4], 0
    // Predicated region
    $region2: #{tpu_custom_call.1} parent=1 // pred_check
      _
    $region3: #{tpu_custom_call.1} parent=1 // pred_check_branch
      %9 = sbr.rel (0) target = $region5
    $region4: #{tpu_custom_call.1} parent=1 // pred_region
      %11 = vsyncadd [#allocation3], 0
      %s13 = sshll.u32 %s0, 4
      %s14 = int_to_ptr.hbm [resolvable:$true] %s13
      %s15 = sshll.u32 [#allocation2], 4
      %s16 = int_to_ptr.vmem [resolvable:$true] %s15
      %18 = dma.hbm_to_vmem [thread:$0]  %s14, 256, %s16, [#allocation3]
    $region5: #{tpu_custom_call.1} parent=1 // pred_fallthru
      _
    // Predicated region
    $region6: #{tpu_custom_call.1} parent=1 // pred_check
      _
    $region7: #{tpu_custom_call.1} parent=1 // pred_check_branch
      %20 = sbr.rel (0) target = $region9
    $region8: #{tpu_custom_call.1} parent=1 // pred_region
      %22 = dma.done [#allocation3], 256
    $region9: #{tpu_custom_call.1} parent=1 // pred_fallthru
      _
    %v23 = vld [vmem:[#allocation2] sm:$0xff]
    %v24 = vld [vmem:[#allocation2 + $0x8] sm:$0xff]
    %v25 = vmul.f32 %v23, 0.5
    %v26 = vmul.f32 %v24, 0.5
    %v27 = vadd.f32 %v25, 0.5
    %v28 = vadd.f32 %v26, 0.5
    %v29 = vmax.f32 %v27, 0.0
    %v30 = vmax.f32 %v28, 0.0
    %v31 = vmin.f32 %v29, 1.0
    %v32 = vmin.f32 %v30, 1.0
    %33 = vst [vmem:[#allocation5] sm:$0xff] %v31
    %34 = vst [vmem:[#allocation5 + $0x8] sm:$0xff] %v32
    // Predicated region
    $region10: #{tpu_custom_call.1} parent=1 // pred_check
      _
    $region11: #{tpu_custom_call.1} parent=1 // pred_check_branch
      %36 = sbr.rel (0) target = $region13
    $region12: #{tpu_custom_call.1} parent=1 // pred_region
      %38 = vsyncadd [#allocation4], 0
      %s40 = sshll.u32 [#allocation5], 4
      %s41 = int_to_ptr.vmem [resolvable:$true] %s40
      %s42 = sshll.u32 %s1, 4
      %s43 = int_to_ptr.hbm [resolvable:$true] %s42
      %45 = dma.vmem_to_hbm [thread:$0]  %s41, 256, %s43, [#allocation4]
    $region13: #{tpu_custom_call.1} parent=1 // pred_fallthru
      _
    // Predicated region
    $region14: #{tpu_custom_call.1} parent=1 // pred_check
      _
    $region15: #{tpu_custom_call.1} parent=1 // pred_check_branch
      %47 = sbr.rel (0) target = $region17
    $region16: #{tpu_custom_call.1} parent=1 // pred_region
      %49 = dma.done [#allocation4], 256
    $region17: #{tpu_custom_call.1} parent=1 // pred_fallthru
      _
    %50 = vsyncpa [#allocation3], 1
    %51 = vsyncpa [#allocation4], 1

</llo_original>
